<compile_context>
chip_gen: v5e
topology: v5e:2x2
jax: 0.10.0
libtpu: 0.0.40
codegen_flags: <defaults>
</compile_context>

<pallas_src>
import functools

import jax
import jax.numpy as jnp
from jax.experimental import pallas as pl
from jax.experimental.pallas import tpu as pltpu

EPS = 1e-5


def _round_up(v, m):
    return -(-v // m) * m


def _sigmoid_layer_kernel(params_ref, x_ref, o_ref, *, n_img, h, hp, w, wp,
                          slots, slot_w, n_strips):
    # params_ref: SMEM (2, 12) -> per conv: [w00..w22 (row-major), bias, gamma, beta]
    #             (bias is intentionally never read: cancelled by training-mode BN)
    # x_ref / o_ref: VMEM (n_strips, hp, wp) f32.  Each strip holds `slots`
    #   images packed along lanes, each followed by one zero gap column; rows
    #   >= h and lanes past the packed region are zero.
    x = x_ref[...]

    # ---- valid-pixel mask (built once, reused by both conv/BN stages) ------
    full = (n_img == n_strips * slots)          # no partially-filled last strip
    mshape = (1, hp, wp) if full else (n_strips, hp, wp)
    ri = jax.lax.broadcasted_iota(jnp.int32, mshape, 1)
    ci = jax.lax.broadcasted_iota(jnp.int32, mshape, 2)
    si = None if full else jax.lax.broadcasted_iota(jnp.int32, mshape, 0)

    col_valid = None
    for s in range(slots):                      # static unroll (slots is small)
        c0 = s * slot_w
        cond = (ci < c0 + w) if s == 0 else ((ci >= c0) & (ci < c0 + w))
        if not full:
            cond = cond & ((si * slots + s) < n_img)
        col_valid = cond if col_valid is None else (col_valid | cond)
    valid = col_valid if h == hp else (col_valid & (ri < h))
    mask = valid.astype(jnp.float32)
    inv_n = 1.0 / float(n_img * h * w)

    # Wrap-edge masks: only needed when a dimension has NO zero halo at all
    # (h == hp, or unpacked w == wp).  Otherwise the zero pad rows / gap
    # columns supply the conv boundary zeros through the circular roll.
    need_row_edge = (h == hp)
    need_col_edge = (slots == 1) and (w == wp)
    if need_row_edge:
        r2 = jax.lax.broadcasted_iota(jnp.int32, (1, hp, wp), 1)
        not_row_first = (r2 > 0).astype(jnp.float32)
        not_row_last = (r2 < hp - 1).astype(jnp.float32)
    if need_col_edge:
        c2 = jax.lax.broadcasted_iota(jnp.int32, (1, hp, wp), 2)
        not_col_first = (c2 > 0).astype(jnp.float32)
        not_col_last = (c2 < wp - 1).astype(jnp.float32)

    def conv3x3_bn(hin, c):
        # 3x3 cross-correlation (nn.Conv2d), stride 1, zero padding 1, with
        # only 4 XLU rolls: 2 lane rolls on the input + 2 sublane rolls on the
        # per-kernel-row horizontal sums.
        xl = pltpu.roll(hin, shift=1, axis=2)         # hin[:, :, j-1]
        xr = pltpu.roll(hin, shift=wp - 1, axis=2)    # hin[:, :, j+1]
        if need_col_edge:
            xl = xl * not_col_first
            xr = xr * not_col_last
        s_top = (params_ref[c, 0] * xl + params_ref[c, 1] * hin
                 + params_ref[c, 2] * xr)             # needs source row i-1
        s_mid = (params_ref[c, 3] * xl + params_ref[c, 4] * hin
                 + params_ref[c, 5] * xr)
        s_bot = (params_ref[c, 6] * xl + params_ref[c, 7] * hin
                 + params_ref[c, 8] * xr)             # needs source row i+1
        top = pltpu.roll(s_top, shift=1, axis=1)      # s_top[:, i-1, :]
        bot = pltpu.roll(s_bot, shift=hp - 1, axis=1) # s_bot[:, i+1, :]
        if need_row_edge:
            top = top * not_row_first
            bot = bot * not_row_last
        acc = top + s_mid + bot
        # NOTE: conv bias (params_ref[c, 9]) is intentionally never read — a
        # scalar bias is exactly cancelled by the *training-mode* BN mean
        # subtraction over the same valid region.  This breaks if anyone
        # switches to eval-mode (running-stats) BN or per-tile statistics.

        # BatchNorm2d (training mode): biased batch stats over the valid
        # (N, H, W) pixels only; single pass (sum + sum-of-squares).
        # TODO(synk): switch to a two-pass variance if inputs with
        # |mean| >> std ever push the 1e-4 tolerance.
        masked = acc * mask
        ssum = jnp.sum(masked)
        ssq = jnp.sum(masked * acc)                   # sum(acc^2) over valid region
        mean = ssum * inv_n
        var = jnp.maximum(ssq * inv_n - mean * mean, 0.0)
        scale = params_ref[c, 10] * jax.lax.rsqrt(var + EPS)   # gamma * rsqrt
        shift = params_ref[c, 11] - mean * scale               # beta - mean*scale
        return acc * scale + shift

    # conv1 -> BN1 -> tanh; re-zero gaps/pad so conv2's rolls wrap zeros.
    # TODO(synk): on v6e/v7x the MAC chain + tanh/sigmoid could run in bf16
    # (keep the reductions in f32) for ~2x VPU/EUP throughput; kept f32 so the
    # same kernel is exact on v5e (no bf16 VPU/EUP) and within 1e-4 everywhere.
    h1 = jnp.tanh(conv3x3_bn(x, 0)) * mask
    # conv2 -> BN2 -> tanh -> sigmoid; packing/padding is undone by the wrapper.
    o_ref[...] = jax.nn.sigmoid(jnp.tanh(conv3x3_bn(h1, 1)))


@jax.jit
def sigmoid_layer_forward(x_nchw, params):
    n, c, h, w = x_nchw.shape
    assert c == 1, "SigmoidLayer uses single-channel convs"

    # ---- layout plan: lane-dense strips ------------------------------------
    # Small images are packed side by side along the 128-lane axis, each
    # followed by one zero gap column (which doubles as the conv zero halo);
    # rows are padded only up to a multiple of 8 (no forced +1 halo row/col).
    hp = _round_up(h, 8)
    if w + 1 <= 128:
        wp = 128
        slot_w = w + 1                                # image + 1 zero gap column
        slots = max(1, min(n, 128 // slot_w))
    else:
        wp = _round_up(w, 128)
        slot_w = w                                    # no gap; edge mask if w == wp
        slots = 1
    n_strips = -(-n // slots)

    x3 = x_nchw.reshape(n, h, w).astype(jnp.float32)
    if slot_w > w:                                    # packed layout
        pad_imgs = n_strips * slots - n
        xp = jnp.pad(x3, ((0, pad_imgs), (0, hp - h), (0, 1)))
        xp = xp.reshape(n_strips, slots, hp, slot_w).transpose(0, 2, 1, 3)
        xp = xp.reshape(n_strips, hp, slots * slot_w)
        xp = jnp.pad(xp, ((0, 0), (0, 0), (0, wp - slots * slot_w)))
    else:
        xp = jnp.pad(x3, ((0, 0), (0, hp - h), (0, wp - w)))
    # TODO(synk): for large inputs, replace this XLA pack/pad (and the un-pack
    # below) with in-kernel manual DMA packing (memory_space=pl.ANY +
    # pltpu.make_async_copy) to avoid the extra HBM round trips.

    # ~12 full-size f32 temporaries live at the peak of the fused body.
    block_bytes = n_strips * hp * wp * 4
    want = max(16 * 1024 * 1024, 12 * block_bytes + (2 << 20))
    try:
        cap = pltpu.get_tpu_info().vmem_capacity_bytes  # 128 MiB v5e/v6e, 64 MiB v7x
    except Exception:
        cap = 64 * 1024 * 1024                          # conservative (v7x) fallback
    vmem_limit = int(min(want, (cap * 5) // 8))
    # TODO(synk): beyond ~vmem_limit/12 of payload, switch to a tiled two-phase
    # pipeline (row-strip grid / emit_pipeline: partial BN sums -> combine ->
    # normalize) with a "parallel" leading axis so v7x's 2nd TensorCore is used;
    # per-tile BN stats alone would be wrong (stats are global over N,H,W).

    kernel = functools.partial(
        _sigmoid_layer_kernel, n_img=n, h=h, hp=hp, w=w, wp=wp,
        slots=slots, slot_w=slot_w, n_strips=n_strips)

    out = pl.pallas_call(
        kernel,
        out_shape=jax.ShapeDtypeStruct((n_strips, hp, wp), jnp.float32),
        in_specs=[
            pl.BlockSpec(memory_space=pltpu.MemorySpace.SMEM),  # scalar params
            pl.BlockSpec(memory_space=pltpu.MemorySpace.VMEM),  # packed image strips
        ],
        out_specs=pl.BlockSpec(memory_space=pltpu.MemorySpace.VMEM),
        compiler_params=pltpu.CompilerParams(vmem_limit_bytes=vmem_limit),
    )(params.astype(jnp.float32), xp)

    if slot_w > w:                                    # un-pack
        o = out[:, :h, :slots * slot_w].reshape(n_strips, h, slots, slot_w)
        o = o.transpose(0, 2, 1, 3).reshape(n_strips * slots, h, slot_w)
        o = o[:n, :, :w]
    else:
        o = out[:, :h, :w]
    return o.reshape(n, 1, h, w)


def init_params(key):
    """Deterministic init mimicking PyTorch Conv2d default (bound = 1/sqrt(9))."""
    bound = 1.0 / 3.0
    k1, k2, k3, k4 = jax.random.split(key, 4)
    w1 = jax.random.uniform(k1, (9,), minval=-bound, maxval=bound)
    b1 = jax.random.uniform(k2, (1,), minval=-bound, maxval=bound)
    w2 = jax.random.uniform(k3, (9,), minval=-bound, maxval=bound)
    b2 = jax.random.uniform(k4, (1,), minval=-bound, maxval=bound)
    gamma_beta = jnp.array([1.0, 0.0])  # fresh BatchNorm2d: gamma=1, beta=0
    row1 = jnp.concatenate([w1, b1, gamma_beta])
    row2 = jnp.concatenate([w2, b2, gamma_beta])
    return jnp.stack([row1, row2]).astype(jnp.float32)  # (2, 12)


def reference_forward(x_nchw, params):
    """Pure-JAX reference of the PyTorch forward (training-mode BN, bias kept)."""
    def conv_bn(hin, c):
        wgt = params[c, :9].reshape(1, 1, 3, 3)
        out = jax.lax.conv_general_dilated(
            hin, wgt, window_strides=(1, 1), padding="SAME",
            dimension_numbers=("NCHW", "OIHW", "NCHW")) + params[c, 9]
        mean = jnp.mean(out)
        var = jnp.mean((out - mean) ** 2)          # biased variance
        return (out - mean) / jnp.sqrt(var + EPS) * params[c, 10] + params[c, 11]

    h = jnp.tanh(conv_bn(x_nchw.astype(jnp.float32), 0))   # conv1 -> BN1 -> tanh
    h = jnp.tanh(conv_bn(h, 1))                            # conv2 -> BN2 -> tanh
    return jax.nn.sigmoid(h)                               # sigmoid


if __name__ == "__main__":
    key = jax.random.PRNGKey(0)
    kx, kp = jax.random.split(key)
    x = jax.random.normal(kx, (2, 1, 16, 16), dtype=jnp.float32)  # NCHW, C=1
    params = init_params(kp)

    out = jax.block_until_ready(sigmoid_layer_forward(x, params))
    ref = reference_forward(x, params)

    assert out.shape == (2, 1, 16, 16)
    max_diff = jnp.max(jnp.abs(out - ref))
    assert jnp.allclose(out, ref, atol=1e-4, rtol=1e-4), f"max abs diff = {max_diff}"

    print("KERNEL_OK")
</pallas_src>

<mosaic_0001>
module attributes {stable_mosaic.version = 11 : i64} {
  func.func @_sigmoid_layer_kernel(%arg0: memref<2x12xf32, #tpu.memory_space<smem>>, %arg1: memref<1x16x128xf32, #tpu.memory_space<vmem>>, %arg2: memref<1x16x128xf32, #tpu.memory_space<vmem>>) attributes {dimension_semantics = [], scalar_prefetch = 0 : i64, scratch_operands = 0 : i64, tpu.core_type = #tpu.core_type<tc>} {
    %c0 = arith.constant 0 : index
    %c0_0 = arith.constant 0 : index
    %c0_1 = arith.constant 0 : index
    %0 = vector.load %arg1[%c0, %c0_0, %c0_1] : memref<1x16x128xf32, #tpu.memory_space<vmem>>, vector<1x16x128xf32>
    %1 = tpu.iota {dimensions = array<i32: 2>} : vector<1x16x128xi32>
    %c16_i32 = arith.constant 16 : i32
    %2 = vector.broadcast %c16_i32 : i32 to vector<1x16x128xi32>
    %3 = arith.cmpi slt, %1, %2 : vector<1x16x128xi32>
    %c17_i32 = arith.constant 17 : i32
    %4 = vector.broadcast %c17_i32 : i32 to vector<1x16x128xi32>
    %5 = arith.cmpi sge, %1, %4 : vector<1x16x128xi32>
    %c33_i32 = arith.constant 33 : i32
    %6 = vector.broadcast %c33_i32 : i32 to vector<1x16x128xi32>
    %7 = arith.cmpi slt, %1, %6 : vector<1x16x128xi32>
    %8 = arith.andi %5, %7 : vector<1x16x128xi1>
    %9 = arith.ori %3, %8 : vector<1x16x128xi1>
    %10 = arith.extui %9 : vector<1x16x128xi1> to vector<1x16x128xi32>
    %11 = arith.sitofp %10 : vector<1x16x128xi32> to vector<1x16x128xf32>
    %12 = tpu.iota {dimensions = array<i32: 1>} : vector<1x16x128xi32>
    %c0_i32 = arith.constant 0 : i32
    %13 = vector.broadcast %c0_i32 : i32 to vector<1x16x128xi32>
    %14 = arith.cmpi sgt, %12, %13 : vector<1x16x128xi32>
    %15 = arith.extui %14 : vector<1x16x128xi1> to vector<1x16x128xi32>
    %16 = arith.sitofp %15 : vector<1x16x128xi32> to vector<1x16x128xf32>
    %c15_i32 = arith.constant 15 : i32
    %17 = vector.broadcast %c15_i32 : i32 to vector<1x16x128xi32>
    %18 = arith.cmpi slt, %12, %17 : vector<1x16x128xi32>
    %19 = arith.extui %18 : vector<1x16x128xi1> to vector<1x16x128xi32>
    %20 = arith.sitofp %19 : vector<1x16x128xi32> to vector<1x16x128xf32>
    %c1_i32 = arith.constant 1 : i32
    %21 = tpu.dynamic_rotate %0 by %c1_i32 dim 2 : vector<1x16x128xf32>, i32 -> vector<1x16x128xf32>
    %c127_i32 = arith.constant 127 : i32
    %22 = tpu.dynamic_rotate %0 by %c127_i32 dim 2 : vector<1x16x128xf32>, i32 -> vector<1x16x128xf32>
    %c0_2 = arith.constant 0 : index
    %c0_3 = arith.constant 0 : index
    %23 = memref.load %arg0[%c0_2, %c0_3] : memref<2x12xf32, #tpu.memory_space<smem>>
    %24 = vector.broadcast %23 : f32 to vector<1x16x128xf32>
    %25 = arith.mulf %24, %21 : vector<1x16x128xf32>
    %c0_4 = arith.constant 0 : index
    %c1 = arith.constant 1 : index
    %26 = memref.load %arg0[%c0_4, %c1] : memref<2x12xf32, #tpu.memory_space<smem>>
    %27 = vector.broadcast %26 : f32 to vector<1x16x128xf32>
    %28 = arith.mulf %27, %0 : vector<1x16x128xf32>
    %29 = arith.addf %25, %28 : vector<1x16x128xf32>
    %c0_5 = arith.constant 0 : index
    %c2 = arith.constant 2 : index
    %30 = memref.load %arg0[%c0_5, %c2] : memref<2x12xf32, #tpu.memory_space<smem>>
    %31 = vector.broadcast %30 : f32 to vector<1x16x128xf32>
    %32 = arith.mulf %31, %22 : vector<1x16x128xf32>
    %33 = arith.addf %29, %32 : vector<1x16x128xf32>
    %c0_6 = arith.constant 0 : index
    %c3 = arith.constant 3 : index
    %34 = memref.load %arg0[%c0_6, %c3] : memref<2x12xf32, #tpu.memory_space<smem>>
    %35 = vector.broadcast %34 : f32 to vector<1x16x128xf32>
    %36 = arith.mulf %35, %21 : vector<1x16x128xf32>
    %c0_7 = arith.constant 0 : index
    %c4 = arith.constant 4 : index
    %37 = memref.load %arg0[%c0_7, %c4] : memref<2x12xf32, #tpu.memory_space<smem>>
    %38 = vector.broadcast %37 : f32 to vector<1x16x128xf32>
    %39 = arith.mulf %38, %0 : vector<1x16x128xf32>
    %40 = arith.addf %36, %39 : vector<1x16x128xf32>
    %c0_8 = arith.constant 0 : index
    %c5 = arith.constant 5 : index
    %41 = memref.load %arg0[%c0_8, %c5] : memref<2x12xf32, #tpu.memory_space<smem>>
    %42 = vector.broadcast %41 : f32 to vector<1x16x128xf32>
    %43 = arith.mulf %42, %22 : vector<1x16x128xf32>
    %44 = arith.addf %40, %43 : vector<1x16x128xf32>
    %c0_9 = arith.constant 0 : index
    %c6 = arith.constant 6 : index
    %45 = memref.load %arg0[%c0_9, %c6] : memref<2x12xf32, #tpu.memory_space<smem>>
    %46 = vector.broadcast %45 : f32 to vector<1x16x128xf32>
    %47 = arith.mulf %46, %21 : vector<1x16x128xf32>
    %c0_10 = arith.constant 0 : index
    %c7 = arith.constant 7 : index
    %48 = memref.load %arg0[%c0_10, %c7] : memref<2x12xf32, #tpu.memory_space<smem>>
    %49 = vector.broadcast %48 : f32 to vector<1x16x128xf32>
    %50 = arith.mulf %49, %0 : vector<1x16x128xf32>
    %51 = arith.addf %47, %50 : vector<1x16x128xf32>
    %c0_11 = arith.constant 0 : index
    %c8 = arith.constant 8 : index
    %52 = memref.load %arg0[%c0_11, %c8] : memref<2x12xf32, #tpu.memory_space<smem>>
    %53 = vector.broadcast %52 : f32 to vector<1x16x128xf32>
    %54 = arith.mulf %53, %22 : vector<1x16x128xf32>
    %55 = arith.addf %51, %54 : vector<1x16x128xf32>
    %c1_i32_12 = arith.constant 1 : i32
    %56 = tpu.dynamic_rotate %33 by %c1_i32_12 dim 1 : vector<1x16x128xf32>, i32 -> vector<1x16x128xf32>
    %c15_i32_13 = arith.constant 15 : i32
    %57 = tpu.dynamic_rotate %55 by %c15_i32_13 dim 1 : vector<1x16x128xf32>, i32 -> vector<1x16x128xf32>
    %58 = arith.mulf %56, %16 : vector<1x16x128xf32>
    %59 = arith.mulf %57, %20 : vector<1x16x128xf32>
    %60 = arith.addf %58, %44 : vector<1x16x128xf32>
    %61 = arith.addf %60, %59 : vector<1x16x128xf32>
    %62 = arith.mulf %61, %11 : vector<1x16x128xf32>
    %63 = vector.shape_cast %62 : vector<1x16x128xf32> to vector<1x1x16x128xf32>
    %cst = arith.constant dense<0.000000e+00> : vector<1xf32>
    %64 = vector.multi_reduction <add>, %63, %cst [1, 2, 3] : vector<1x1x16x128xf32> to vector<1xf32>
    %65 = vector.shape_cast %64 : vector<1xf32> to vector<1x1x1x1xf32>
    %66 = vector.extract %65[0, 0, 0, 0] : f32 from vector<1x1x1x1xf32>
    %67 = arith.mulf %62, %61 : vector<1x16x128xf32>
    %68 = vector.shape_cast %67 : vector<1x16x128xf32> to vector<1x1x16x128xf32>
    %cst_14 = arith.constant dense<0.000000e+00> : vector<1xf32>
    %69 = vector.multi_reduction <add>, %68, %cst_14 [1, 2, 3] : vector<1x1x16x128xf32> to vector<1xf32>
    %70 = vector.shape_cast %69 : vector<1xf32> to vector<1x1x1x1xf32>
    %71 = vector.extract %70[0, 0, 0, 0] : f32 from vector<1x1x1x1xf32>
    %cst_15 = arith.constant 0.001953125 : f32
    %72 = arith.mulf %66, %cst_15 : f32
    %cst_16 = arith.constant 0.001953125 : f32
    %73 = arith.mulf %71, %cst_16 : f32
    %74 = arith.mulf %72, %72 : f32
    %75 = arith.subf %73, %74 : f32
    %cst_17 = arith.constant 0.000000e+00 : f32
    %76 = arith.maximumf %75, %cst_17 : f32
    %c0_18 = arith.constant 0 : index
    %c10 = arith.constant 10 : index
    %77 = memref.load %arg0[%c0_18, %c10] : memref<2x12xf32, #tpu.memory_space<smem>>
    %cst_19 = arith.constant 9.99999974E-6 : f32
    %78 = arith.addf %76, %cst_19 : f32
    %79 = math.rsqrt %78 : f32
    %80 = arith.mulf %77, %79 : f32
    %c0_20 = arith.constant 0 : index
    %c11 = arith.constant 11 : index
    %81 = memref.load %arg0[%c0_20, %c11] : memref<2x12xf32, #tpu.memory_space<smem>>
    %82 = arith.mulf %72, %80 : f32
    %83 = arith.subf %81, %82 : f32
    %84 = vector.broadcast %80 : f32 to vector<1x16x128xf32>
    %85 = arith.mulf %61, %84 : vector<1x16x128xf32>
    %86 = vector.broadcast %83 : f32 to vector<1x16x128xf32>
    %87 = arith.addf %85, %86 : vector<1x16x128xf32>
    %88 = math.tanh %87 : vector<1x16x128xf32>
    %89 = arith.mulf %88, %11 : vector<1x16x128xf32>
    %c1_i32_21 = arith.constant 1 : i32
    %90 = tpu.dynamic_rotate %89 by %c1_i32_21 dim 2 : vector<1x16x128xf32>, i32 -> vector<1x16x128xf32>
    %c127_i32_22 = arith.constant 127 : i32
    %91 = tpu.dynamic_rotate %89 by %c127_i32_22 dim 2 : vector<1x16x128xf32>, i32 -> vector<1x16x128xf32>
    %c1_23 = arith.constant 1 : index
    %c0_24 = arith.constant 0 : index
    %92 = memref.load %arg0[%c1_23, %c0_24] : memref<2x12xf32, #tpu.memory_space<smem>>
    %93 = vector.broadcast %92 : f32 to vector<1x16x128xf32>
    %94 = arith.mulf %93, %90 : vector<1x16x128xf32>
    %c1_25 = arith.constant 1 : index
    %c1_26 = arith.constant 1 : index
    %95 = memref.load %arg0[%c1_25, %c1_26] : memref<2x12xf32, #tpu.memory_space<smem>>
    %96 = vector.broadcast %95 : f32 to vector<1x16x128xf32>
    %97 = arith.mulf %96, %89 : vector<1x16x128xf32>
    %98 = arith.addf %94, %97 : vector<1x16x128xf32>
    %c1_27 = arith.constant 1 : index
    %c2_28 = arith.constant 2 : index
    %99 = memref.load %arg0[%c1_27, %c2_28] : memref<2x12xf32, #tpu.memory_space<smem>>
    %100 = vector.broadcast %99 : f32 to vector<1x16x128xf32>
    %101 = arith.mulf %100, %91 : vector<1x16x128xf32>
    %102 = arith.addf %98, %101 : vector<1x16x128xf32>
    %c1_29 = arith.constant 1 : index
    %c3_30 = arith.constant 3 : index
    %103 = memref.load %arg0[%c1_29, %c3_30] : memref<2x12xf32, #tpu.memory_space<smem>>
    %104 = vector.broadcast %103 : f32 to vector<1x16x128xf32>
    %105 = arith.mulf %104, %90 : vector<1x16x128xf32>
    %c1_31 = arith.constant 1 : index
    %c4_32 = arith.constant 4 : index
    %106 = memref.load %arg0[%c1_31, %c4_32] : memref<2x12xf32, #tpu.memory_space<smem>>
    %107 = vector.broadcast %106 : f32 to vector<1x16x128xf32>
    %108 = arith.mulf %107, %89 : vector<1x16x128xf32>
    %109 = arith.addf %105, %108 : vector<1x16x128xf32>
    %c1_33 = arith.constant 1 : index
    %c5_34 = arith.constant 5 : index
    %110 = memref.load %arg0[%c1_33, %c5_34] : memref<2x12xf32, #tpu.memory_space<smem>>
    %111 = vector.broadcast %110 : f32 to vector<1x16x128xf32>
    %112 = arith.mulf %111, %91 : vector<1x16x128xf32>
    %113 = arith.addf %109, %112 : vector<1x16x128xf32>
    %c1_35 = arith.constant 1 : index
    %c6_36 = arith.constant 6 : index
    %114 = memref.load %arg0[%c1_35, %c6_36] : memref<2x12xf32, #tpu.memory_space<smem>>
    %115 = vector.broadcast %114 : f32 to vector<1x16x128xf32>
    %116 = arith.mulf %115, %90 : vector<1x16x128xf32>
    %c1_37 = arith.constant 1 : index
    %c7_38 = arith.constant 7 : index
    %117 = memref.load %arg0[%c1_37, %c7_38] : memref<2x12xf32, #tpu.memory_space<smem>>
    %118 = vector.broadcast %117 : f32 to vector<1x16x128xf32>
    %119 = arith.mulf %118, %89 : vector<1x16x128xf32>
    %120 = arith.addf %116, %119 : vector<1x16x128xf32>
    %c1_39 = arith.constant 1 : index
    %c8_40 = arith.constant 8 : index
    %121 = memref.load %arg0[%c1_39, %c8_40] : memref<2x12xf32, #tpu.memory_space<smem>>
    %122 = vector.broadcast %121 : f32 to vector<1x16x128xf32>
    %123 = arith.mulf %122, %91 : vector<1x16x128xf32>
    %124 = arith.addf %120, %123 : vector<1x16x128xf32>
    %c1_i32_41 = arith.constant 1 : i32
    %125 = tpu.dynamic_rotate %102 by %c1_i32_41 dim 1 : vector<1x16x128xf32>, i32 -> vector<1x16x128xf32>
    %c15_i32_42 = arith.constant 15 : i32
    %126 = tpu.dynamic_rotate %124 by %c15_i32_42 dim 1 : vector<1x16x128xf32>, i32 -> vector<1x16x128xf32>
    %127 = arith.mulf %125, %16 : vector<1x16x128xf32>
    %128 = arith.mulf %126, %20 : vector<1x16x128xf32>
    %129 = arith.addf %127, %113 : vector<1x16x128xf32>
    %130 = arith.addf %129, %128 : vector<1x16x128xf32>
    %131 = arith.mulf %130, %11 : vector<1x16x128xf32>
    %132 = vector.shape_cast %131 : vector<1x16x128xf32> to vector<1x1x16x128xf32>
    %cst_43 = arith.constant dense<0.000000e+00> : vector<1xf32>
    %133 = vector.multi_reduction <add>, %132, %cst_43 [1, 2, 3] : vector<1x1x16x128xf32> to vector<1xf32>
    %134 = vector.shape_cast %133 : vector<1xf32> to vector<1x1x1x1xf32>
    %135 = vector.extract %134[0, 0, 0, 0] : f32 from vector<1x1x1x1xf32>
    %136 = arith.mulf %131, %130 : vector<1x16x128xf32>
    %137 = vector.shape_cast %136 : vector<1x16x128xf32> to vector<1x1x16x128xf32>
    %cst_44 = arith.constant dense<0.000000e+00> : vector<1xf32>
    %138 = vector.multi_reduction <add>, %137, %cst_44 [1, 2, 3] : vector<1x1x16x128xf32> to vector<1xf32>
    %139 = vector.shape_cast %138 : vector<1xf32> to vector<1x1x1x1xf32>
    %140 = vector.extract %139[0, 0, 0, 0] : f32 from vector<1x1x1x1xf32>
    %cst_45 = arith.constant 0.001953125 : f32
    %141 = arith.mulf %135, %cst_45 : f32
    %cst_46 = arith.constant 0.001953125 : f32
    %142 = arith.mulf %140, %cst_46 : f32
    %143 = arith.mulf %141, %141 : f32
    %144 = arith.subf %142, %143 : f32
    %cst_47 = arith.constant 0.000000e+00 : f32
    %145 = arith.maximumf %144, %cst_47 : f32
    %c1_48 = arith.constant 1 : index
    %c10_49 = arith.constant 10 : index
    %146 = memref.load %arg0[%c1_48, %c10_49] : memref<2x12xf32, #tpu.memory_space<smem>>
    %cst_50 = arith.constant 9.99999974E-6 : f32
    %147 = arith.addf %145, %cst_50 : f32
    %148 = math.rsqrt %147 : f32
    %149 = arith.mulf %146, %148 : f32
    %c1_51 = arith.constant 1 : index
    %c11_52 = arith.constant 11 : index
    %150 = memref.load %arg0[%c1_51, %c11_52] : memref<2x12xf32, #tpu.memory_space<smem>>
    %151 = arith.mulf %141, %149 : f32
    %152 = arith.subf %150, %151 : f32
    %153 = vector.broadcast %149 : f32 to vector<1x16x128xf32>
    %154 = arith.mulf %130, %153 : vector<1x16x128xf32>
    %155 = vector.broadcast %152 : f32 to vector<1x16x128xf32>
    %156 = arith.addf %154, %155 : vector<1x16x128xf32>
    %157 = math.tanh %156 : vector<1x16x128xf32>
    %158 = arith.negf %157 : vector<1x16x128xf32>
    %159 = math.exp %158 : vector<1x16x128xf32>
    %cst_53 = arith.constant 1.000000e+00 : f32
    %160 = vector.broadcast %cst_53 : f32 to vector<1x16x128xf32>
    %161 = arith.addf %160, %159 : vector<1x16x128xf32>
    %162 = arith.divf %160, %161 : vector<1x16x128xf32>
    %c0_54 = arith.constant 0 : index
    %c0_55 = arith.constant 0 : index
    %c0_56 = arith.constant 0 : index
    %163 = vector.load %arg2[%c0_54, %c0_55, %c0_56] : memref<1x16x128xf32, #tpu.memory_space<vmem>>, vector<1x16x128xf32>
    tpu.vector_store %arg2[%c0_54, %c0_55, %c0_56], %162 {strides = array<i32>} : memref<1x16x128xf32, #tpu.memory_space<vmem>>, vector<1x16x128xf32>,
    return
  }
}

</mosaic_0001>

<llo_original>
// kernel: sigmoid_layer_forward.1
$region0: #{sigmoid_layer_forward.1}
  #allocation0 [shape = 'u32[]', space=smem, size = 0x4, offset = 0x4, fixed_abs, tag = 'smem constant byte address 0x4 - core index']
  #allocation1 [shape = 'u32[72,128]{1,0:T(1,128)}', space=vmem, size = 0x9000, scoped, tag = 'internal scratch']
  %s0 = inlined_call_operand.vmem [shape: f32[2,12], index: 0, kind: input, shape index: {}]
  %s1 = inlined_call_operand.vmem [shape: f32[1,16,128], index: 1, kind: input, shape index: {}]
  %s2 = inlined_call_operand.vmem [shape: f32[1,16,128], index: 2, kind: output, shape index: {}]
  %s3 = sld [smem:[#allocation0]]
  $region22: #{sigmoid_layer_forward.1} parent=0
    _
  %s5 = ssub.s32 1, %s3
  %s6 = scalar_select 0, %s5, %s3
  $region1: #{sigmoid_layer_forward.1} parent=0
    #allocation2 [shape = 'u8[1024]{0}', space=smem, size = 0x400, scoped, tag = 'input window, operand 0, single buffered']
    #allocation3 [shape = 's32[1]{0}', space=sflag, size = 0x4, scoped, tag = 'scoped memory for sigmoid_layer_forward.1']
    %7 = vsyncpa [#allocation3], 0
    // Predicated region
    $region2: #{sigmoid_layer_forward.1} parent=1 // pred_check
      _
    $region3: #{sigmoid_layer_forward.1} parent=1 // pred_check_branch
      %9 = sbr.rel (0) target = $region5
    $region4: #{sigmoid_layer_forward.1} parent=1 // pred_region
      %11 = vsyncadd [#allocation3], 0
      %s13 = sshll.u32 %s0, 4
      %s14 = int_to_ptr.vmem [resolvable:$true] %s13
      %16 = dma.vmem_to_smem %s14, 32, [#allocation2], [#allocation3]
    $region5: #{sigmoid_layer_forward.1} parent=1 // pred_fallthru
      _
    // Predicated region
    $region6: #{sigmoid_layer_forward.1} parent=1 // pred_check
      _
    $region7: #{sigmoid_layer_forward.1} parent=1 // pred_check_branch
      %18 = sbr.rel (0) target = $region9
    $region8: #{sigmoid_layer_forward.1} parent=1 // pred_region
      _
    $region9: #{sigmoid_layer_forward.1} parent=1 // pred_fallthru
      _
    // Predicated region
    $region10: #{sigmoid_layer_forward.1} parent=1 // pred_check
      _
    $region11: #{sigmoid_layer_forward.1} parent=1 // pred_check_branch
      %20 = sbr.rel (0) target = $region13
    $region12: #{sigmoid_layer_forward.1} parent=1 // pred_region
      %22 = dma.done [#allocation3], 32
    $region13: #{sigmoid_layer_forward.1} parent=1 // pred_fallthru
      _
    %23 = sfence
    %v24 = vld [vmem:[%s1] sm:$0xff]
    %v25 = vld [vmem:[%s1 + $0x8] sm:$0xff]
    %v26 = vlaneseq
    %v27 = vand.u32 %v26, 127
    %vm28 = vcmp.lt.s32.totalorder %v27, 16
    %vm29 = vcmp.ge.s32.totalorder %v27, 17
    %vm30 = vcmp.lt.s32.totalorder %v27, 33
    %vm31 = vmand %vm29, %vm30
    %vm32 = vmor %vm28, %vm31
    %v33 = vsel %vm32, 1, 0
    %v34 = vcvt.s32.f32 %v33
    %v35 = vlaneseq
    %v36 = vshrl.u32 %v35, 7
    %v37 = vadd.s32 %v36, 8
    %vm38 = vcmp.gt.s32.totalorder %v36, 0
    %vm39 = vcmp.gt.s32.totalorder %v37, 0
    %v40 = vsel %vm38, 1, 0
    %v41 = vsel %vm39, 1, 0
    %v42 = vcvt.s32.f32 %v40
    %v43 = vcvt.s32.f32 %v41
    %vm44 = vcmp.lt.s32.totalorder %v36, 15
    %vm45 = vcmp.lt.s32.totalorder %v37, 15
    %v46 = vsel %vm44, 1, 0
    %v47 = vsel %vm45, 1, 0
    %v48 = vcvt.s32.f32 %v46
    %v49 = vcvt.s32.f32 %v47
    %50 = vrot.lane.b32.xlu0 %v24, 1
    %v51 = vpop.permute.xlu0 %50
    %52 = vrot.lane.b32.xlu0 %v25, 1
    %v53 = vpop.permute.xlu0 %52
    %54 = vrot.lane.b32.xlu0 %v24, 127
    %v55 = vpop.permute.xlu0 %54
    %56 = vrot.lane.b32.xlu0 %v25, 127
    %v57 = vpop.permute.xlu0 %56
    %s58 = sld [smem:[#allocation2]]
    %v59 = vstv %s58
    %v60 = vmul.f32 %v59, %v51
    %v61 = vmul.f32 %v59, %v53
    %s62 = sld [smem:[#allocation2 + $0x1]]
    %v63 = vstv %s62
    %v64 = vmul.f32 %v63, %v24
    %v65 = vmul.f32 %v63, %v25
    %v66 = vadd.f32 %v60, %v64
    %v67 = vadd.f32 %v61, %v65
    %s68 = sld [smem:[#allocation2 + $0x2]]
    %v69 = vstv %s68
    %v70 = vmul.f32 %v69, %v55
    %v71 = vmul.f32 %v69, %v57
    %v72 = vadd.f32 %v66, %v70
    %v73 = vadd.f32 %v67, %v71
    %s74 = sld [smem:[#allocation2 + $0x3]]
    %v75 = vstv %s74
    %v76 = vmul.f32 %v75, %v51
    %v77 = vmul.f32 %v75, %v53
    %s78 = sld [smem:[#allocation2 + $0x4]]
    %v79 = vstv %s78
    %v80 = vmul.f32 %v79, %v24
    %v81 = vmul.f32 %v79, %v25
    %v82 = vadd.f32 %v76, %v80
    %v83 = vadd.f32 %v77, %v81
    %s84 = sld [smem:[#allocation2 + $0x5]]
    %v85 = vstv %s84
    %v86 = vmul.f32 %v85, %v55
    %v87 = vmul.f32 %v85, %v57
    %v88 = vadd.f32 %v82, %v86
    %v89 = vadd.f32 %v83, %v87
    %s90 = sld [smem:[#allocation2 + $0x6]]
    %v91 = vstv %s90
    %v92 = vmul.f32 %v91, %v51
    %v93 = vmul.f32 %v91, %v53
    %s94 = sld [smem:[#allocation2 + $0x7]]
    %v95 = vstv %s94
    %v96 = vmul.f32 %v95, %v24
    %v97 = vmul.f32 %v95, %v25
    %v98 = vadd.f32 %v92, %v96
    %v99 = vadd.f32 %v93, %v97
    %s100 = sld [smem:[#allocation2 + $0x8]]
    %v101 = vstv %s100
    %v102 = vmul.f32 %v101, %v55
    %v103 = vmul.f32 %v101, %v57
    %v104 = vadd.f32 %v98, %v102
    %v105 = vadd.f32 %v99, %v103
    %v106 = vrot.slane %v72, 7
    %v107 = vrot.slane %v73, 7
    %vm108 = vcmp.lt.s32.totalorder %v36, 1
    %v109 = vsel %vm108, %v106, %v107
    %v110 = vsel %vm108, %v107, %v106
    %v111 = vrot.slane %v104, 1
    %v112 = vrot.slane %v105, 1
    %vm113 = vcmp.lt.s32.totalorder %v36, 7
    %v114 = vsel %vm113, %v111, %v112
    %v115 = vsel %vm113, %v112, %v111
    %v116 = vmul.f32 %v110, %v42
    %v117 = vmul.f32 %v109, %v43
    %v118 = vmul.f32 %v114, %v48
    %v119 = vmul.f32 %v115, %v49
    %v120 = vadd.f32 %v116, %v88
    %v121 = vadd.f32 %v117, %v89
    %v122 = vadd.f32 %v120, %v118
    %v123 = vadd.f32 %v121, %v119
    %v124 = vmul.f32 %v122, %v34
    %v125 = vmul.f32 %v123, %v34
    %v126 = vadd.f32 %v124, %v125
    %127 = vadd.xlane.f32.xlu0 %v126
    %v128 = vpop.xlane.xlu0 %127
    %v129 = vrot.slane %v128, 4
    %v130 = vadd.f32 %v128, %v129
    %v131 = vrot.slane %v130, 2
    %v132 = vadd.f32 %v130, %v131
    %v133 = vrot.slane %v132, 1
    %v134 = vadd.f32 %v132, %v133
    %s135 = vtos %v134
    %v136 = vmul.f32 %v124, %v122
    %v137 = vmul.f32 %v125, %v123
    %v138 = vadd.f32 %v136, %v137
    %139 = vadd.xlane.f32.xlu0 %v138
    %v140 = vpop.xlane.xlu0 %139
    %v141 = vrot.slane %v140, 4
    %v142 = vadd.f32 %v140, %v141
    %v143 = vrot.slane %v142, 2
    %v144 = vadd.f32 %v142, %v143
    %v145 = vrot.slane %v144, 1
    %v146 = vadd.f32 %v144, %v145
    %s147 = vtos %v146
    %s148 = smul.f32 %s135, 0.001953125
    %s149 = smul.f32 %s147, 0.001953125
    %s150 = smul.f32 %s148, %s148
    %s151 = ssub.f32 %s149, %s150
    %s152 = smax.f32 %s151, 0.0
    %s153 = sld [smem:[#allocation2 + $0xa]]
    %s154 = sadd.f32 %s152, 1e-05
    %v155 = vstv %s154
    %v156 = vrsqrt.pop %v155
    %v157 = vmul.f32 %v156, %v155
    %v158 = vmul.f32 %v157, %v156
    %v159 = vmul.f32 0.5, %v158
    %v160 = vsub.f32 1.5, %v159
    %v161 = vmul.f32 %v156, %v160
    %vm162 = vweird.f32 %v155
    %vm163 = vweird.f32 %v156
    %vm164 = vmor %vm162, %vm163
    %v165 = vsel %vm164, %v156, %v161
    %s166 = vtos %v165
    %s167 = smul.f32 %s153, %s166
    %s168 = sld [smem:[#allocation2 + $0xb]]
    %s169 = smul.f32 %s148, %s167
    %s170 = ssub.f32 %s168, %s169
    %v171 = vstv %s167
    %v172 = vmul.f32 %v122, %v171
    %v173 = vmul.f32 %v123, %v171
    %v174 = vstv %s170
    %v175 = vadd.f32 %v172, %v174
    %v176 = vadd.f32 %v173, %v174
    %v177 = vtanh.pop %v175
    %v178 = vtanh.pop %v176
    %v179 = vmul.f32 %v177, %v34
    %v180 = vmul.f32 %v178, %v34
    %181 = vrot.lane.b32.xlu0 %v179, 1
    %v182 = vpop.permute.xlu0 %181
    %183 = vrot.lane.b32.xlu0 %v180, 1
    %v184 = vpop.permute.xlu0 %183
    %185 = vrot.lane.b32.xlu0 %v179, 127
    %v186 = vpop.permute.xlu0 %185
    %187 = vrot.lane.b32.xlu0 %v180, 127
    %v188 = vpop.permute.xlu0 %187
    %s189 = sld [smem:[#allocation2 + $0x80]]
    %v190 = vstv %s189
    %v191 = vmul.f32 %v190, %v182
    %v192 = vmul.f32 %v190, %v184
    %s193 = sld [smem:[#allocation2 + $0x81]]
    %v194 = vstv %s193
    %v195 = vmul.f32 %v194, %v179
    %v196 = vmul.f32 %v194, %v180
    %v197 = vadd.f32 %v191, %v195
    %v198 = vadd.f32 %v192, %v196
    %s199 = sld [smem:[#allocation2 + $0x82]]
    %v200 = vstv %s199
    %v201 = vmul.f32 %v200, %v186
    %v202 = vmul.f32 %v200, %v188
    %v203 = vadd.f32 %v197, %v201
    %v204 = vadd.f32 %v198, %v202
    %s205 = sld [smem:[#allocation2 + $0x83]]
    %v206 = vstv %s205
    %v207 = vmul.f32 %v206, %v182
    %v208 = vmul.f32 %v206, %v184
    %s209 = sld [smem:[#allocation2 + $0x84]]
    %v210 = vstv %s209
    %v211 = vmul.f32 %v210, %v179
    %v212 = vmul.f32 %v210, %v180
    %v213 = vadd.f32 %v207, %v211
    %v214 = vadd.f32 %v208, %v212
    %s215 = sld [smem:[#allocation2 + $0x85]]
    %v216 = vstv %s215
    %v217 = vmul.f32 %v216, %v186
    %v218 = vmul.f32 %v216, %v188
    %v219 = vadd.f32 %v213, %v217
    %v220 = vadd.f32 %v214, %v218
    %s221 = sld [smem:[#allocation2 + $0x86]]
    %v222 = vstv %s221
    %v223 = vmul.f32 %v222, %v182
    %v224 = vmul.f32 %v222, %v184
    %s225 = sld [smem:[#allocation2 + $0x87]]
    %v226 = vstv %s225
    %v227 = vmul.f32 %v226, %v179
    %v228 = vmul.f32 %v226, %v180
    %v229 = vadd.f32 %v223, %v227
    %v230 = vadd.f32 %v224, %v228
    %s231 = sld [smem:[#allocation2 + $0x88]]
    %v232 = vstv %s231
    %v233 = vmul.f32 %v232, %v186
    %v234 = vmul.f32 %v232, %v188
    %v235 = vadd.f32 %v229, %v233
    %v236 = vadd.f32 %v230, %v234
    %v237 = vrot.slane %v203, 7
    %v238 = vrot.slane %v204, 7
    %v239 = vsel %vm108, %v237, %v238
    %v240 = vsel %vm108, %v238, %v237
    %v241 = vrot.slane %v235, 1
    %v242 = vrot.slane %v236, 1
    %v243 = vsel %vm113, %v241, %v242
    %v244 = vsel %vm113, %v242, %v241
    %v245 = vmul.f32 %v240, %v42
    %v246 = vmul.f32 %v239, %v43
    %v247 = vmul.f32 %v243, %v48
    %v248 = vmul.f32 %v244, %v49
    %v249 = vadd.f32 %v245, %v219
    %v250 = vadd.f32 %v246, %v220
    %v251 = vadd.f32 %v249, %v247
    %v252 = vadd.f32 %v250, %v248
    %v253 = vmul.f32 %v251, %v34
    %v254 = vmul.f32 %v252, %v34
    %v255 = vadd.f32 %v253, %v254
    %256 = vadd.xlane.f32.xlu0 %v255
    %v257 = vpop.xlane.xlu0 %256
    %v258 = vrot.slane %v257, 4
    %v259 = vadd.f32 %v257, %v258
    %v260 = vrot.slane %v259, 2
    %v261 = vadd.f32 %v259, %v260
    %v262 = vrot.slane %v261, 1
    %v263 = vadd.f32 %v261, %v262
    %s264 = vtos %v263
    %v265 = vmul.f32 %v253, %v251
    %v266 = vmul.f32 %v254, %v252
    %v267 = vadd.f32 %v265, %v266
    %268 = vadd.xlane.f32.xlu0 %v267
    %v269 = vpop.xlane.xlu0 %268
    %v270 = vrot.slane %v269, 4
    %v271 = vadd.f32 %v269, %v270
    %v272 = vrot.slane %v271, 2
    %v273 = vadd.f32 %v271, %v272
    %v274 = vrot.slane %v273, 1
    %v275 = vadd.f32 %v273, %v274
    %s276 = vtos %v275
    %s277 = smul.f32 %s264, 0.001953125
    %s278 = smul.f32 %s276, 0.001953125
    %s279 = smul.f32 %s277, %s277
    %s280 = ssub.f32 %s278, %s279
    %s281 = smax.f32 %s280, 0.0
    %s282 = sld [smem:[#allocation2 + $0x8a]]
    %s283 = sadd.f32 %s281, 1e-05
    %v284 = vstv %s283
    %v285 = vrsqrt.pop %v284
    %v286 = vmul.f32 %v285, %v284
    %v287 = vmul.f32 %v286, %v285
    %v288 = vmul.f32 0.5, %v287
    %v289 = vsub.f32 1.5, %v288
    %v290 = vmul.f32 %v285, %v289
    %vm291 = vweird.f32 %v284
    %vm292 = vweird.f32 %v285
    %vm293 = vmor %vm291, %vm292
    %v294 = vsel %vm293, %v285, %v290
    %s295 = vtos %v294
    %s296 = smul.f32 %s282, %s295
    %s297 = sld [smem:[#allocation2 + $0x8b]]
    %s298 = smul.f32 %s277, %s296
    %s299 = ssub.f32 %s297, %s298
    %v300 = vstv %s296
    %v301 = vmul.f32 %v251, %v300
    %v302 = vmul.f32 %v252, %v300
    %v303 = vstv %s299
    %v304 = vadd.f32 %v301, %v303
    %v305 = vadd.f32 %v302, %v303
    %v306 = vtanh.pop %v304
    %v307 = vtanh.pop %v305
    %v308 = vxor.u32 %v306, 2147483648
    %v309 = vxor.u32 %v307, 2147483648
    %v310 = vmul.f32 %v308, 1.442695
    %v311 = vpow.pop %v310
    %v312 = vmul.f32 %v309, 1.442695
    %v313 = vpow.pop %v312
    %v314 = vadd.f32 %v311, 1.0
    %v315 = vadd.f32 %v313, 1.0
    %v316 = vrcp.pop %v314
    %v317 = vmul.f32 %v314, %v316
    %v318 = vsub.f32 1.0, %v317
    %v319 = vmul.f32 %v316, %v318
    %v320 = vadd.f32 %v316, %v319
    %vm321 = vweird.f32 %v314
    %vm322 = vweird.f32 %v316
    %vm323 = vmor %vm321, %vm322
    %v324 = vsel %vm323, %v316, %v320
    %v325 = vand.u32 2147483647, %v314
    %vm326 = vcmp.eq.f32.partialorder %v325, 8.507059e+37
    %v327 = vand.u32 %v314, 2147483648
    %v328 = vor.u32 1.1754944e-38, %v327
    %v329 = vsel %vm326, %v328, %v324
    %v330 = vmul.f32 1.0, %v329
    %v331 = vrcp.pop %v315
    %v332 = vmul.f32 %v315, %v331
    %v333 = vsub.f32 1.0, %v332
    %v334 = vmul.f32 %v331, %v333
    %v335 = vadd.f32 %v331, %v334
    %vm336 = vweird.f32 %v315
    %vm337 = vweird.f32 %v331
    %vm338 = vmor %vm336, %vm337
    %v339 = vsel %vm338, %v331, %v335
    %v340 = vand.u32 2147483647, %v315
    %vm341 = vcmp.eq.f32.partialorder %v340, 8.507059e+37
    %v342 = vand.u32 %v315, 2147483648
    %v343 = vor.u32 1.1754944e-38, %v342
    %v344 = vsel %vm341, %v343, %v339
    %v345 = vmul.f32 1.0, %v344
    %346 = vst [vmem:[%s2] sm:$0xff] %v330
    %347 = vst [vmem:[%s2 + $0x8] sm:$0xff] %v345
    // Predicated region
    $region14: #{sigmoid_layer_forward.1} parent=1 // pred_check
      _
    $region15: #{sigmoid_layer_forward.1} parent=1 // pred_check_branch
      %349 = sbr.rel (0) target = $region17
    $region16: #{sigmoid_layer_forward.1} parent=1 // pred_region
      _
    $region17: #{sigmoid_layer_forward.1} parent=1 // pred_fallthru
      _
    // Predicated region
    $region18: #{sigmoid_layer_forward.1} parent=1 // pred_check
      _
    $region19: #{sigmoid_layer_forward.1} parent=1 // pred_check_branch
      %351 = sbr.rel (0) target = $region21
    $region20: #{sigmoid_layer_forward.1} parent=1 // pred_region
      _
    $region21: #{sigmoid_layer_forward.1} parent=1 // pred_fallthru
      _
    %352 = vsyncpa [#allocation3], 1

</llo_original>
